<compile_context>
chip_gen: v7x
topology: tpu7x:2x2x1
jax: 0.10.0
libtpu: 0.0.40
codegen_flags: <defaults>
</compile_context>

<pallas_src>
import math
import numpy as np
import jax
import jax.numpy as jnp
from jax import lax
from jax.experimental import pallas as pl
from jax.experimental.pallas import tpu as pltpu

NEG_INF = -1e37


# ----------------------------- host-side sampler glue (numpy, like PyTorch original) ----
class LogUniformSampler:
    def __init__(self, ntokens, seed=0):
        self.N = ntokens
        i = np.arange(self.N, dtype=np.float64)
        self.prob = (np.log(i + 2.0) - np.log(i + 1.0)) / np.log(self.N + 1.0)
        self.rng = np.random.default_rng(seed)

    def expected_count(self, num_tries, samples):
        samples = np.asarray(samples, dtype=np.int64)
        return -(np.exp(num_tries * np.log(1.0 - self.prob[samples])) - 1.0)

    def sample(self, size, labels):
        log_N = np.log(self.N)
        x = self.rng.uniform(0.0, 1.0, size=size)
        samples = np.floor(np.exp(x * log_N)).astype(np.int64) - 1
        true_freq = self.expected_count(size, labels)
        sample_freq = self.expected_count(size, samples)
        return samples, true_freq, sample_freq


# ----------------------------- Pallas kernel ---------------------------------------------
def sampled_logits_kernel(x_ref, sw_ref, sb_ref, mc_ref, out_ref, acc_ref):
    """Computes sampled logits: x @ W_s^T + (b_s - log(sample_freq)) with accidental-match mask.

    x_ref:  (TB, TK) bf16     inputs tile
    sw_ref: (TK, TS) bf16     sampled weights, pre-transposed to (H, S)
    sb_ref: (1, TS)  f32      bias[sample] - log(sample_freq)
    mc_ref: (TB, 1)  int32    per-row accidental-match sampled-column (-1 if none)
    out_ref:(TB, TS) f32      sampled logits
    acc_ref:(TB, TS) f32      VMEM accumulator across the H (reduction) grid axis
    """
    j = pl.program_id(1)          # S-tile index
    k = pl.program_id(2)          # H (reduction) tile index
    nk = pl.num_programs(2)

    @pl.when(k == 0)
    def _init_acc():
        acc_ref[...] = jnp.zeros_like(acc_ref)

    # MXU: bf16 x bf16 -> f32 accumulate, native (M,K)@(K,N) layout, no in-kernel transpose.
    acc_ref[...] += jnp.dot(x_ref[...], sw_ref[...],
                            preferred_element_type=jnp.float32)

    @pl.when(k == nk - 1)
    def _finalize():
        blk_b, blk_s = acc_ref.shape
        logits = acc_ref[...] + sb_ref[...]                                  # (TB, TS) f32
        col = lax.broadcasted_iota(jnp.int32, (blk_b, blk_s), 1) + j * blk_s
        logits = jnp.where(col == mc_ref[...], jnp.float32(NEG_INF), logits)
        out_ref[...] = logits


# ----------------------------- wrapper ----------------------------------------------------
def _round_up(x, m):
    return ((x + m - 1) // m) * m


def _pick_tiles(B_pad, S_pad, H_pad, budget_bytes=32 << 20):
    """Largest tiles whose double-buffered footprint fits the VMEM budget."""
    def cands(pad, options):
        out = [c for c in options if pad % c == 0]
        return out if out else [pad]

    tb_c = cands(B_pad, (512, 256, 128, 64, 32, 16, 8))
    tk_c = cands(H_pad, (2048, 1024, 512, 256, 128))
    ts_c = cands(S_pad, (2048, 1024, 512, 256, 128))

    def footprint(tb, ts, tk):
        per_step = (tb * tk * 2      # x tile (bf16)
                    + tk * ts * 2    # sampled-weight tile (bf16)
                    + tb * ts * 4    # output tile (f32)
                    + ts * 4 + tb * 4)
        return 2 * per_step + tb * ts * 4   # double-buffered blocks + f32 accumulator scratch

    for tb in tb_c:          # favor batch tile, then reduction tile, then S tile
        for tk in tk_c:
            for ts in ts_c:
                if footprint(tb, ts, tk) <= budget_bytes:
                    return tb, ts, tk
    return tb_c[-1], ts_c[-1], tk_c[-1]


@jax.jit
def sampled_softmax_forward(inputs, weight, bias, labels, sample_ids, true_freq, sample_freq):
    """Training-mode forward of SampledSoftmax. Returns (logits (B, 1+S), new_targets (B,))."""
    B, H = inputs.shape
    S = int(sample_ids.shape[0])

    inputs_f32 = inputs.astype(jnp.float32)
    labels = labels.astype(jnp.int32)
    sample_ids = sample_ids.astype(jnp.int32)

    # ---- true-logit path: trivially memory-bound, kept in plain XLA (f32) ----------------
    true_w = jnp.take(weight, labels, axis=0).astype(jnp.float32)                 # (B, H)
    true_b = jnp.take(bias, labels).astype(jnp.float32)                           # (B,)
    true_logits = (jnp.sum(inputs_f32 * true_w, axis=1) + true_b
                   - jnp.log(true_freq.astype(jnp.float32)))                      # (B,)

    # ---- accidental-match columns, fully in-JAX (last occurrence per id wins) ------------
    s_idx = jnp.arange(S, dtype=jnp.int32)
    matches = labels[:, None] == sample_ids[None, :]                              # (B, S)
    match_col = jnp.max(jnp.where(matches, s_idx[None, :], -1), axis=1)           # (B,) int32
    match_col = match_col.astype(jnp.int32).reshape(B, 1)

    # ---- sampled-path operands ------------------------------------------------------------
    samp_w_t = jnp.take(weight, sample_ids, axis=0).astype(jnp.bfloat16).T        # (H, S) bf16
    samp_b = (jnp.take(bias, sample_ids).astype(jnp.float32)
              - jnp.log(sample_freq.astype(jnp.float32))).reshape(1, S)           # (1, S)

    # pad to tile-friendly shapes (8 on sublane axes, 128 on lane axes)
    B_pad = _round_up(B, 8)
    H_pad = _round_up(H, 128)
    S_pad = _round_up(S, 128)
    TB, TS, TK = _pick_tiles(B_pad, S_pad, H_pad)

    x_p  = jnp.pad(inputs.astype(jnp.bfloat16), ((0, B_pad - B), (0, H_pad - H)))
    sw_p = jnp.pad(samp_w_t, ((0, H_pad - H), (0, S_pad - S)))
    sb_p = jnp.pad(samp_b, ((0, 0), (0, S_pad - S)))
    mc_p = jnp.pad(match_col, ((0, B_pad - B), (0, 0)), constant_values=-1)

    grid = (B_pad // TB, S_pad // TS, H_pad // TK)

    flops = 2 * B_pad * H_pad * S_pad
    bytes_accessed = (x_p.size * 2 + sw_p.size * 2 + sb_p.size * 4 + mc_p.size * 4
                      + B_pad * S_pad * 4)

    samp_out = pl.pallas_call(
        sampled_logits_kernel,
        out_shape=jax.ShapeDtypeStruct((B_pad, S_pad), jnp.float32),
        grid_spec=pltpu.PrefetchScalarGridSpec(
            num_scalar_prefetch=0,
            grid=grid,
            in_specs=[
                pl.BlockSpec((TB, TK), lambda i, j, k: (i, k)),   # inputs (B, H) bf16
                pl.BlockSpec((TK, TS), lambda i, j, k: (k, j)),   # sampled weights^T (H, S) bf16
                pl.BlockSpec((1, TS),  lambda i, j, k: (0, j)),   # bias[sample] - log(samp_freq)
                pl.BlockSpec((TB, 1),  lambda i, j, k: (i, 0)),   # accidental-match column
            ],
            out_specs=pl.BlockSpec((TB, TS), lambda i, j, k: (i, j)),
            scratch_shapes=[pltpu.VMEM((TB, TS), jnp.float32)],   # matmul accumulator
        ),
        compiler_params=pltpu.CompilerParams(
            dimension_semantics=("parallel", "parallel", "arbitrary"),
            vmem_limit_bytes=48 << 20),
        cost_estimate=pl.CostEstimate(flops=flops, transcendentals=0,
                                      bytes_accessed=bytes_accessed),
    )(x_p, sw_p, sb_p, mc_p)

    logits = jnp.concatenate([true_logits[:, None], samp_out[:B, :S]], axis=1)    # (B, 1+S)
    # TODO(synk): torch returns int64 ("long") targets; default JAX config is 32-bit ints.
    new_targets = jnp.zeros((B,), dtype=jnp.int32)
    return logits, new_targets


# ----------------------------- main -------------------------------------------------------
if __name__ == "__main__":
    ntokens, nsampled, nhid, batch = 50, 16, 32, 8

    key = jax.random.PRNGKey(0)
    k_w, k_b, k_x, k_lbl = jax.random.split(key, 4)

    # nn.Linear(nhid, ntokens): weight (ntokens, nhid); custom uniform init per module __init__
    stdv = math.sqrt(3.0 / (ntokens + nhid))
    weight = jax.random.uniform(k_w, (ntokens, nhid), jnp.float32, -stdv, stdv)
    # bias: default nn.Linear init U(-1/sqrt(fan_in), 1/sqrt(fan_in))
    b_bound = 1.0 / math.sqrt(nhid)
    bias = jax.random.uniform(k_b, (ntokens,), jnp.float32, -b_bound, b_bound)

    inputs = jax.random.normal(k_x, (batch, nhid), jnp.float32)
    labels = jax.random.randint(k_lbl, (batch,), 0, ntokens, jnp.int32)

    sampler = LogUniformSampler(ntokens, seed=0)
    samples_np, true_freq_np, sample_freq_np = sampler.sample(nsampled, np.asarray(labels))
    sample_ids = jnp.asarray(samples_np.astype(np.int32))
    true_freq = jnp.asarray(true_freq_np.astype(np.float32))
    sample_freq = jnp.asarray(sample_freq_np.astype(np.float32))

    logits, new_targets = sampled_softmax_forward(
        inputs, weight, bias, labels, sample_ids, true_freq, sample_freq)
    jax.block_until_ready(logits)

    # --- pure numpy reference check -------------------------------------------------------
    x_np = np.asarray(inputs, dtype=np.float32)
    W_np = np.asarray(weight, dtype=np.float32)
    b_np = np.asarray(bias, dtype=np.float32)
    lbl_np = np.asarray(labels)
    sid_np = np.asarray(sample_ids)

    # kernel runs the sampled matmul with bf16 operands (f32 accumulate) — quantize
    # the reference operands identically.
    x_bf = np.asarray(jnp.asarray(x_np).astype(jnp.bfloat16).astype(jnp.float32))
    sw_bf = np.asarray(jnp.asarray(W_np[sid_np]).astype(jnp.bfloat16).astype(jnp.float32))

    tl = (np.sum(x_np * W_np[lbl_np], axis=1) + b_np[lbl_np]
          - np.log(true_freq_np.astype(np.float32)))
    sl = (x_bf @ sw_bf.T + b_np[sid_np]
          - np.log(sample_freq_np.astype(np.float32))).astype(np.float32)
    # accidental-match dict semantics: last occurrence per sampled id wins
    sample_dict = {}
    for idx, s in enumerate(sid_np):
        sample_dict[int(s)] = idx
    for r, l in enumerate(lbl_np):
        c = sample_dict.get(int(l), -1)
        if c >= 0:
            sl[r, c] = NEG_INF
    ref = np.concatenate([tl[:, None].astype(np.float32), sl], axis=1)
    np.testing.assert_allclose(np.asarray(logits), ref, rtol=2e-4, atol=2e-4)

    print("KERNEL_OK")
</pallas_src>

<mosaic_0001>
module attributes {stable_mosaic.version = 11 : i64} {
  func.func @sampled_logits_kernel(%arg0: i32, %arg1: i32, %arg2: i32, %arg3: memref<8x128xbf16, #tpu.memory_space<vmem>>, %arg4: memref<128x128xbf16, #tpu.memory_space<vmem>>, %arg5: memref<1x128xf32, #tpu.memory_space<vmem>>, %arg6: memref<8x1xi32, #tpu.memory_space<vmem>>, %arg7: memref<8x128xf32, #tpu.memory_space<vmem>>, %arg8: memref<8x128xf32, #tpu.memory_space<vmem>>) attributes {dimension_semantics = [#tpu.dimension_semantics<parallel>, #tpu.dimension_semantics<parallel>, #tpu.dimension_semantics<arbitrary>], iteration_bounds = array<i64: 1, 1, 1>, scalar_prefetch = 0 : i64, scratch_operands = 1 : i64, tpu.core_type = #tpu.core_type<tc>, window_params = [{transform_indices = @transform_0, window_bounds = array<i64: 8, 128>}, {transform_indices = @transform_1, window_bounds = array<i64: 128, 128>}, {transform_indices = @transform_2, window_bounds = array<i64: 1, 128>}, {transform_indices = @transform_3, window_bounds = array<i64: 8, 1>}, {transform_indices = @transform_4, window_bounds = array<i64: 8, 128>}]} {
    %c0_i32 = arith.constant 0 : i32
    %0 = arith.cmpi eq, %arg2, %c0_i32 : i32
    %1 = arith.extui %0 : i1 to i32
    %c0_i32_0 = arith.constant 0 : i32
    %2 = arith.cmpi ne, %1, %c0_i32_0 : i32
    scf.if %2 {
      %cst_10 = arith.constant 0.000000e+00 : f32
      %12 = vector.broadcast %cst_10 : f32 to vector<8x128xf32>
      %c0_11 = arith.constant 0 : index
      %c0_12 = arith.constant 0 : index
      %13 = vector.load %arg8[%c0_11, %c0_12] : memref<8x128xf32, #tpu.memory_space<vmem>>, vector<8x128xf32>
      tpu.vector_store %arg8[%c0_11, %c0_12], %12 {strides = array<i32>} : memref<8x128xf32, #tpu.memory_space<vmem>>, vector<8x128xf32>,
    } else {
    }
    %c0 = arith.constant 0 : index
    %c0_1 = arith.constant 0 : index
    %3 = vector.load %arg8[%c0, %c0_1] : memref<8x128xf32, #tpu.memory_space<vmem>>, vector<8x128xf32>
    %c0_2 = arith.constant 0 : index
    %c0_3 = arith.constant 0 : index
    %4 = vector.load %arg3[%c0_2, %c0_3] : memref<8x128xbf16, #tpu.memory_space<vmem>>, vector<8x128xbf16>
    %c0_4 = arith.constant 0 : index
    %c0_5 = arith.constant 0 : index
    %5 = vector.load %arg4[%c0_4, %c0_5] : memref<128x128xbf16, #tpu.memory_space<vmem>>, vector<128x128xbf16>
    %cst = arith.constant dense<0.000000e+00> : vector<8x128xf32>
    %6 = tpu.matmul %4, %5, %cst {dimension_numbers = #tpu.dot_dimension_numbers<[1], [0], [0], [1], [0, 0, 1, 1], [], []>} : vector<8x128xbf16>, vector<128x128xbf16>, vector<8x128xf32> -> vector<8x128xf32>
    %7 = arith.addf %3, %6 : vector<8x128xf32>
    %c0_6 = arith.constant 0 : index
    %c0_7 = arith.constant 0 : index
    %8 = vector.load %arg8[%c0_6, %c0_7] : memref<8x128xf32, #tpu.memory_space<vmem>>, vector<8x128xf32>
    tpu.vector_store %arg8[%c0_6, %c0_7], %7 {strides = array<i32>} : memref<8x128xf32, #tpu.memory_space<vmem>>, vector<8x128xf32>,
    %c0_i32_8 = arith.constant 0 : i32
    %9 = arith.cmpi eq, %arg2, %c0_i32_8 : i32
    %10 = arith.extui %9 : i1 to i32
    %c0_i32_9 = arith.constant 0 : i32
    %11 = arith.cmpi ne, %10, %c0_i32_9 : i32
    scf.if %11 {
      %c0_10 = arith.constant 0 : index
      %c0_11 = arith.constant 0 : index
      %12 = vector.load %arg8[%c0_10, %c0_11] : memref<8x128xf32, #tpu.memory_space<vmem>>, vector<8x128xf32>
      %c0_12 = arith.constant 0 : index
      %c0_13 = arith.constant 0 : index
      %13 = vector.load %arg5[%c0_12, %c0_13] : memref<1x128xf32, #tpu.memory_space<vmem>>, vector<1x128xf32>
      %14 = vector.broadcast %13 : vector<1x128xf32> to vector<8x128xf32>
      %15 = arith.addf %12, %14 : vector<8x128xf32>
      %16 = tpu.iota {dimensions = array<i32: 1>} : vector<8x128xi32>
      %c128_i32 = arith.constant 128 : i32
      %17 = arith.muli %arg1, %c128_i32 : i32
      %18 = vector.broadcast %17 : i32 to vector<8x128xi32>
      %19 = arith.addi %16, %18 : vector<8x128xi32>
      %c0_14 = arith.constant 0 : index
      %c0_15 = arith.constant 0 : index
      %20 = vector.load %arg6[%c0_14, %c0_15] : memref<8x1xi32, #tpu.memory_space<vmem>>, vector<8x1xi32>
      %21 = vector.broadcast %20 : vector<8x1xi32> to vector<8x128xi32>
      %22 = arith.cmpi eq, %19, %21 : vector<8x128xi32>
      %cst_16 = arith.constant -9.99999993E+36 : f32
      %23 = vector.broadcast %cst_16 : f32 to vector<8x128xf32>
      %24 = arith.select %22, %23, %15 : vector<8x128xi1>, vector<8x128xf32>
      %c0_17 = arith.constant 0 : index
      %c0_18 = arith.constant 0 : index
      %25 = vector.load %arg7[%c0_17, %c0_18] : memref<8x128xf32, #tpu.memory_space<vmem>>, vector<8x128xf32>
      tpu.vector_store %arg7[%c0_17, %c0_18], %24 {strides = array<i32>} : memref<8x128xf32, #tpu.memory_space<vmem>>, vector<8x128xf32>,
    } else {
    }
    return
  }
  func.func @transform_0(%arg0: i32, %arg1: i32, %arg2: i32) -> (i32, i32) {
    %c0_i32 = arith.constant 0 : i32
    return %arg0, %arg2 : i32, i32
  }
  func.func @transform_1(%arg0: i32, %arg1: i32, %arg2: i32) -> (i32, i32) {
    %c0_i32 = arith.constant 0 : i32
    return %arg2, %arg1 : i32, i32
  }
  func.func @transform_2(%arg0: i32, %arg1: i32, %arg2: i32) -> (i32, i32) {
    %c0_i32 = arith.constant 0 : i32
    %c0_i32_0 = arith.constant 0 : i32
    return %c0_i32, %arg1 : i32, i32
  }
  func.func @transform_3(%arg0: i32, %arg1: i32, %arg2: i32) -> (i32, i32) {
    %c0_i32 = arith.constant 0 : i32
    %c0_i32_0 = arith.constant 0 : i32
    return %arg0, %c0_i32 : i32, i32
  }
  func.func @transform_4(%arg0: i32, %arg1: i32, %arg2: i32) -> (i32, i32) {
    %c0_i32 = arith.constant 0 : i32
    return %arg0, %arg1 : i32, i32
  }
}

</mosaic_0001>

<llo_original>
// kernel: sampled_softmax_forward.1
$region0: #{sampled_softmax_forward.1}
  #allocation0 [shape = 'u32[]', space=smem, size = 0x4, offset = 0x4, fixed_abs, tag = 'smem constant byte address 0x4 - core index']
  #allocation1 [shape = 'u32[144,128]{1,0:T(1,128)}', space=vmem, size = 0x12000, scoped, tag = 'internal scratch']
  #allocation2 [shape = 'f32[8,128]{1,0:T(8,128)}', space=vmem, size = 0x1000, scoped, tag = 'scratch operand']
  %s0 = inlined_call_operand.vmem [shape: bf16[8,128], index: 0, kind: input, shape index: {}]
  %s1 = inlined_call_operand.vmem [shape: bf16[128,128], index: 1, kind: input, shape index: {}]
  %s2 = inlined_call_operand.vmem [shape: f32[1,128], index: 2, kind: input, shape index: {}]
  %s3 = inlined_call_operand.vmem [shape: s32[8,1], index: 3, kind: input, shape index: {}]
  %s4 = inlined_call_operand.vmem [shape: f32[8,128], index: 4, kind: output, shape index: {}]
  %s5 = sld [smem:[#allocation0]]
  $region34: #{sampled_softmax_forward.1} parent=0
    _
  %s7 = ssub.s32 1, %s5
  %s8 = scalar_select 0, %s7, %s5
  // Predicated region
  $region2: #{sampled_softmax_forward.1} parent=0 // pred_check
    _
  $region3: #{sampled_softmax_forward.1} parent=0 // pred_check_branch
    %10 = sbr.rel (0) target = $region5
  $region4: #{sampled_softmax_forward.1} parent=0 // pred_region
    _
  $region5: #{sampled_softmax_forward.1} parent=0 // pred_fallthru
    _
  // Predicated region
  $region6: #{sampled_softmax_forward.1} parent=0 // pred_check
    _
  $region7: #{sampled_softmax_forward.1} parent=0 // pred_check_branch
    %12 = sbr.rel (0) target = $region9
  $region8: #{sampled_softmax_forward.1} parent=0 // pred_region
    _
  $region9: #{sampled_softmax_forward.1} parent=0 // pred_fallthru
    _
  // Predicated region
  $region10: #{sampled_softmax_forward.1} parent=0 // pred_check
    _
  $region11: #{sampled_softmax_forward.1} parent=0 // pred_check_branch
    %14 = sbr.rel (0) target = $region13
  $region12: #{sampled_softmax_forward.1} parent=0 // pred_region
    _
  $region13: #{sampled_softmax_forward.1} parent=0 // pred_fallthru
    _
  // Predicated region
  $region14: #{sampled_softmax_forward.1} parent=0 // pred_check
    _
  $region15: #{sampled_softmax_forward.1} parent=0 // pred_check_branch
    %16 = sbr.rel (0) target = $region17
  $region16: #{sampled_softmax_forward.1} parent=0 // pred_region
    _
  $region17: #{sampled_softmax_forward.1} parent=0 // pred_fallthru
    _
  %p18 = scmp.eq.s32.totalorder 0, 0
  // Predicated region
  $region18: #{sampled_softmax_forward.1} parent=0 // pred_check
    %p19 = pneg %p18
  $region19: #{sampled_softmax_forward.1} parent=0 // pred_check_branch
    %21 = sbr.rel (%p19) target = $region21
  $region20: #{sampled_softmax_forward.1} parent=0 // pred_region
    %22 = vst [vmem:[#allocation2] sm:$0xff] 0.0
  $region21: #{sampled_softmax_forward.1} parent=0 // pred_fallthru
    _
  %v23 = vld [vmem:[#allocation2] sm:$0xff]
  %v24 = vld [vmem:[%s0] sm:$0xf]
  %v25 = vld [vmem:[%s1] sm:$0xf]
  %v26 = vld [vmem:[%s1 + $0x4] sm:$0xf]
  %v27 = vld [vmem:[%s1 + $0x8] sm:$0xf]
  %v28 = vld [vmem:[%s1 + $0xc] sm:$0xf]
  %v29 = vld [vmem:[%s1 + $0x10] sm:$0xf]
  %v30 = vld [vmem:[%s1 + $0x14] sm:$0xf]
  %v31 = vld [vmem:[%s1 + $0x18] sm:$0xf]
  %v32 = vld [vmem:[%s1 + $0x1c] sm:$0xf]
  %v33 = vld [vmem:[%s1 + $0x20] sm:$0xf]
  %v34 = vld [vmem:[%s1 + $0x24] sm:$0xf]
  %v35 = vld [vmem:[%s1 + $0x28] sm:$0xf]
  %v36 = vld [vmem:[%s1 + $0x2c] sm:$0xf]
  %v37 = vld [vmem:[%s1 + $0x30] sm:$0xf]
  %v38 = vld [vmem:[%s1 + $0x34] sm:$0xf]
  %v39 = vld [vmem:[%s1 + $0x38] sm:$0xf]
  %v40 = vld [vmem:[%s1 + $0x3c] sm:$0xf]
  %v57 = vunpack.c.l.b16 %v25
  %v58 = vunpack.c.l.b16 %v26
  %v59 = vunpack.c.l.b16 %v27
  %v60 = vunpack.c.l.b16 %v28
  %v61 = vunpack.c.l.b16 %v29
  %v62 = vunpack.c.l.b16 %v30
  %v63 = vunpack.c.l.b16 %v31
  %v64 = vunpack.c.l.b16 %v32
  %v65 = vunpack.c.l.b16 %v33
  %v66 = vunpack.c.l.b16 %v34
  %v67 = vunpack.c.l.b16 %v35
  %v68 = vunpack.c.l.b16 %v36
  %v69 = vunpack.c.l.b16 %v37
  %v70 = vunpack.c.l.b16 %v38
  %v71 = vunpack.c.l.b16 %v39
  %v72 = vunpack.c.l.b16 %v40
  %v73 = vpack.c.b16 %v58, %v57
  %v74 = vpack.c.b16 %v60, %v59
  %v75 = vpack.c.b16 %v62, %v61
  %v76 = vpack.c.b16 %v64, %v63
  %v77 = vpack.c.b16 %v66, %v65
  %v78 = vpack.c.b16 %v68, %v67
  %v79 = vpack.c.b16 %v70, %v69
  %v80 = vpack.c.b16 %v72, %v71
  %89 = vmatprep.subr.bf16.mxu0 0
  %90 = vmatpush1.bf16.msra.mxu0 %v73
  %91 = vmatprep.subr.bf16.mxu0 0
  %92 = vmatpush1.bf16.msra.mxu0 %v74
  %93 = vmatprep.subr.bf16.mxu0 0
  %94 = vmatpush1.bf16.msra.mxu0 %v75
  %95 = vmatprep.subr.bf16.mxu0 0
  %96 = vmatpush1.bf16.msra.mxu0 %v76
  %97 = vmatprep.subr.bf16.mxu0 0
  %98 = vmatpush1.bf16.msra.mxu0 %v77
  %99 = vmatprep.subr.bf16.mxu0 0
  %100 = vmatpush1.bf16.msra.mxu0 %v78
  %101 = vmatprep.subr.bf16.mxu0 0
  %102 = vmatpush1.bf16.msra.mxu0 %v79
  %103 = vmatprep.subr.bf16.mxu0 0
  %104 = vmatpush1.bf16.msra.mxu0 %v80
  %105 = vmatprep.subr.bf16.mxu0 0
  %106 = vmatpush1.bf16.msra.mxu0 0
  %107 = vmatprep.subr.bf16.mxu0 0
  %108 = vmatpush1.bf16.msra.mxu0 0
  %109 = vmatprep.subr.bf16.mxu0 0
  %110 = vmatpush1.bf16.msra.mxu0 0
  %111 = vmatprep.subr.bf16.mxu0 0
  %112 = vmatpush1.bf16.msra.mxu0 0
  %113 = vmatprep.subr.bf16.mxu0 0
  %114 = vmatpush1.bf16.msra.mxu0 0
  %115 = vmatprep.subr.bf16.mxu0 0
  %116 = vmatpush1.bf16.msra.mxu0 0
  %117 = vmatprep.subr.bf16.mxu0 0
  %118 = vmatpush1.bf16.msra.mxu0 0
  %119 = vmatprep.subr.bf16.mxu0 0
  %120 = vmatpush1.bf16.msra.mxu0 0
  %121 = vmatprep.mubr.bf16.mxu0 0
  %122 = vmatmul.mubr.bf16.gmra.mrb[0].mxu0 %v24
  %v123 = vpop.f32.mrb[0].mxu0
  %v124 = vadd.f32 0.0, %v123
  %v125 = vpop.f32.mrb[0].mxu0
  %v126 = vpop.f32.mrb[0].mxu0
  %v127 = vpop.f32.mrb[0].mxu0
  %128 = vdwg.mxu0
  %v129 = vadd.f32 %v23, %v124
  %130 = vst [vmem:[#allocation2] sm:$0xff] %v129
  // Predicated region
  $region22: #{sampled_softmax_forward.1} parent=0 // pred_check
    %p131 = pneg %p18
  $region23: #{sampled_softmax_forward.1} parent=0 // pred_check_branch
    %133 = sbr.rel (%p131) target = $region25
  $region24: #{sampled_softmax_forward.1} parent=0 // pred_region
    %v134 = vld [vmem:[#allocation2] sm:$0xff]
    %v135 = vld [vmem:[%s2] sm:$0x1]
    %v137 = vlaneseq
    %v138 = vshrl.u32 %v137, 7
    %v139 = vsub.s32 0, %v138
    %v140 = vrot.slane %v135, %v139
    %v142 = vadd.f32 %v134, %v140
    %v143 = vlaneseq
    %v144 = vand.u32 %v143, 127
    %s145 = smul.u32 0, 128
    %v146 = vstv %s145
    %v147 = vadd.s32 %v144, %v146
    %v148 = vld [vmem:[%s3] sm:$0xff]
    %149 = vset.pattern.permute.xlu0 0
    %150 = vperm.xlu0 %149, %v148
    %v151 = vpop.permute.xlu0 %150
    %vm152 = vcmp.eq.s32.totalorder %v147, %v151
    %v153 = vsel %vm152, -1e+37, %v142
    %154 = vst [vmem:[%s4] sm:$0xff] %v153
  $region25: #{sampled_softmax_forward.1} parent=0 // pred_fallthru
    _
  // Predicated region
  $region26: #{sampled_softmax_forward.1} parent=0 // pred_check
    _
  $region27: #{sampled_softmax_forward.1} parent=0 // pred_check_branch
    %156 = sbr.rel (0) target = $region29
  $region28: #{sampled_softmax_forward.1} parent=0 // pred_region
    _
  $region29: #{sampled_softmax_forward.1} parent=0 // pred_fallthru
    _
  // Predicated region
  $region30: #{sampled_softmax_forward.1} parent=0 // pred_check
    _
  $region31: #{sampled_softmax_forward.1} parent=0 // pred_check_branch
    %158 = sbr.rel (0) target = $region33
  $region32: #{sampled_softmax_forward.1} parent=0 // pred_region
    _
  $region33: #{sampled_softmax_forward.1} parent=0 // pred_fallthru
    _

</llo_original>
